<compile_context>
chip_gen: v7x
topology: tpu7x:2x2x1
jax: 0.10.0
libtpu: 0.0.40
codegen_flags: <defaults>
</compile_context>

<pallas_src>
import functools

import jax
import jax.numpy as jnp
from jax import lax
from jax.experimental import pallas as pl
from jax.experimental.pallas import tpu as pltpu

_LANES = 128
_SUBLANE = 8
_TM_MAX = 4096                      # 4096 x 128 x 4 B = 2 MiB per f32 input block
_VMEM_LIMIT = 32 * 1024 * 1024      # safe on v5e/v6e (128 MiB) and v7x (64 MiB)


def _contrastive_loss_kernel(n_ref, d_ref, l_ref, part_ref, *, margin: float):
    """One grid step: (tm, 128) tile of D/label -> (8, 128) partial sums."""
    i = pl.program_id(0)
    tm = d_ref.shape[0]

    d = d_ref[...].astype(jnp.float32)        # (tm, 128)
    lab = l_ref[...].astype(jnp.float32)      # (tm, 128)

    # (1 - lab) * d^2 + lab * max(margin - d, 0)^2
    #   == d^2 + lab * (hinge^2 - d^2)        (exact for any real-valued label)
    hinge = jnp.maximum(jnp.float32(margin) - d, 0.0)
    d2 = d * d
    contrib = d2 + lab * (hinge * hinge - d2)

    # Mask out-of-range elements (ragged tail and grid-edge padding rows).
    # The true element count n arrives via scalar prefetch in SMEM, so pad /
    # out-of-bounds block contents never affect the result.
    within = (lax.broadcasted_iota(jnp.int32, (tm, _LANES), 0) * _LANES
              + lax.broadcasted_iota(jnp.int32, (tm, _LANES), 1))
    flat = within + i * (tm * _LANES)
    contrib = jnp.where(flat < n_ref[0], contrib, 0.0)

    # (tm, 128) -> (8, 128) partial sums.  The reshape only regroups whole
    # (8, 128) vreg tiles (no relayout); the axis-0 reduce is plain VALU adds.
    part_ref[...] = contrib.reshape(tm // _SUBLANE, _SUBLANE, _LANES).sum(axis=0)


def contrastive_loss(D: jax.Array, label: jax.Array, margin: float = 2.0) -> jax.Array:
    """Pallas TPU implementation of ContrastiveLoss.forward(D, label)."""
    assert D.shape == label.shape, "D and label must have the same shape"

    d_flat = D.reshape(-1)
    l_flat = label.reshape(-1)
    n = d_flat.shape[0]

    # Lane-dense slab: (rows_aligned, 128), rows_aligned a multiple of 8.
    rows = pl.cdiv(n, _LANES)
    rows_aligned = pl.cdiv(rows, _SUBLANE) * _SUBLANE
    tm = min(_TM_MAX, rows_aligned)              # multiple of 8 or full dim
    grid_m = pl.cdiv(rows_aligned, tm)
    n_slab = rows_aligned * _LANES

    if n_slab != n:
        # Only wrapper-side copy; free reshape when n is a multiple of 1024.
        # Pad values are irrelevant (kernel masks against the true n).
        d_flat = jnp.pad(d_flat, (0, n_slab - n))
        l_flat = jnp.pad(l_flat, (0, n_slab - n))
    d2 = d_flat.reshape(rows_aligned, _LANES)
    l2 = l_flat.reshape(rows_aligned, _LANES)

    n_smem = jnp.array([n], dtype=jnp.int32)     # scalar-prefetch operand

    kernel = functools.partial(_contrastive_loss_kernel, margin=float(margin))

    in_bytes = d2.size * d2.dtype.itemsize + l2.size * l2.dtype.itemsize
    out_bytes = grid_m * _SUBLANE * _LANES * 4

    partials = pl.pallas_call(
        kernel,
        out_shape=jax.ShapeDtypeStruct((grid_m * _SUBLANE, _LANES), jnp.float32),
        grid_spec=pltpu.PrefetchScalarGridSpec(
            num_scalar_prefetch=1,
            grid=(grid_m,),
            in_specs=[
                pl.BlockSpec((tm, _LANES), lambda i, n_s: (i, 0)),
                pl.BlockSpec((tm, _LANES), lambda i, n_s: (i, 0)),
            ],
            out_specs=pl.BlockSpec((_SUBLANE, _LANES), lambda i, n_s: (i, 0)),
        ),
        compiler_params=pltpu.CompilerParams(
            dimension_semantics=("parallel",),   # shards steps across TCs on v7x
            vmem_limit_bytes=_VMEM_LIMIT,
        ),
        cost_estimate=pl.CostEstimate(
            flops=8 * n, transcendentals=0,
            bytes_accessed=in_bytes + out_bytes),
    )(n_smem, d2, l2)

    # Tiny final reduction over (grid_m*8, 128) partials, divide by true count.
    return jnp.sum(partials) / jnp.float32(n)


if __name__ == "__main__":
    key = jax.random.PRNGKey(0)
    k_d, k_l = jax.random.split(key)

    batch = 8
    # D: pairwise Euclidean distances (non-negative), label: 0/1 floats.
    D = jax.random.uniform(k_d, (batch,), dtype=jnp.float32) * 3.0
    label = jax.random.bernoulli(k_l, 0.5, (batch,)).astype(jnp.float32)

    loss = contrastive_loss(D, label, margin=2.0)
    jax.block_until_ready(loss)

    # Reference check (plain JAX, same semantics as the PyTorch module).
    ref = jnp.mean(
        (1.0 - label) * D ** 2 + label * jnp.maximum(2.0 - D, 0.0) ** 2
    )
    assert jnp.allclose(loss, ref, rtol=1e-5, atol=1e-6), (loss, ref)

    print("KERNEL_OK")
</pallas_src>

<mosaic_0001>
module attributes {stable_mosaic.version = 11 : i64} {
  func.func @_contrastive_loss_kernel(%arg0: i32, %arg1: memref<1xi32, #tpu.memory_space<smem>>, %arg2: memref<8x128xf32, #tpu.memory_space<vmem>>, %arg3: memref<8x128xf32, #tpu.memory_space<vmem>>, %arg4: memref<8x128xf32, #tpu.memory_space<vmem>>) attributes {dimension_semantics = [#tpu.dimension_semantics<parallel>], iteration_bounds = array<i64: 1>, scalar_prefetch = 1 : i64, scratch_operands = 0 : i64, tpu.core_type = #tpu.core_type<tc>, window_params = [{transform_indices = @transform_0, window_bounds = array<i64: 8, 128>}, {transform_indices = @transform_1, window_bounds = array<i64: 8, 128>}, {transform_indices = @transform_2, window_bounds = array<i64: 8, 128>}]} {
    %c0 = arith.constant 0 : index
    %c0_0 = arith.constant 0 : index
    %0 = vector.load %arg2[%c0, %c0_0] : memref<8x128xf32, #tpu.memory_space<vmem>>, vector<8x128xf32>
    %c0_1 = arith.constant 0 : index
    %c0_2 = arith.constant 0 : index
    %1 = vector.load %arg3[%c0_1, %c0_2] : memref<8x128xf32, #tpu.memory_space<vmem>>, vector<8x128xf32>
    %cst = arith.constant 2.000000e+00 : f32
    %2 = vector.broadcast %cst : f32 to vector<8x128xf32>
    %3 = arith.subf %2, %0 : vector<8x128xf32>
    %cst_3 = arith.constant 0.000000e+00 : f32
    %4 = vector.broadcast %cst_3 : f32 to vector<8x128xf32>
    %5 = arith.maximumf %3, %4 : vector<8x128xf32>
    %6 = arith.mulf %0, %0 : vector<8x128xf32>
    %7 = arith.mulf %5, %5 : vector<8x128xf32>
    %8 = arith.subf %7, %6 : vector<8x128xf32>
    %9 = arith.mulf %1, %8 : vector<8x128xf32>
    %10 = arith.addf %6, %9 : vector<8x128xf32>
    %11 = tpu.iota {dimensions = array<i32: 0>} : vector<8x128xi32>
    %c128_i32 = arith.constant 128 : i32
    %12 = vector.broadcast %c128_i32 : i32 to vector<8x128xi32>
    %13 = arith.muli %11, %12 : vector<8x128xi32>
    %14 = tpu.iota {dimensions = array<i32: 1>} : vector<8x128xi32>
    %15 = arith.addi %13, %14 : vector<8x128xi32>
    %c1024_i32 = arith.constant 1024 : i32
    %16 = arith.muli %arg0, %c1024_i32 : i32
    %17 = vector.broadcast %16 : i32 to vector<8x128xi32>
    %18 = arith.addi %15, %17 : vector<8x128xi32>
    %c0_4 = arith.constant 0 : index
    %19 = memref.load %arg1[%c0_4] : memref<1xi32, #tpu.memory_space<smem>>
    %20 = vector.broadcast %19 : i32 to vector<8x128xi32>
    %21 = arith.cmpi slt, %18, %20 : vector<8x128xi32>
    %cst_5 = arith.constant 0.000000e+00 : f32
    %22 = vector.broadcast %cst_5 : f32 to vector<8x128xf32>
    %23 = arith.select %21, %10, %22 : vector<8x128xi1>, vector<8x128xf32>
    %24 = vector.shape_cast %23 : vector<8x128xf32> to vector<1x8x128xf32>
    %cst_6 = arith.constant dense<0.000000e+00> : vector<8x128xf32>
    %25 = vector.multi_reduction <add>, %24, %cst_6 [0] : vector<1x8x128xf32> to vector<8x128xf32>
    %c0_7 = arith.constant 0 : index
    %c0_8 = arith.constant 0 : index
    %26 = vector.load %arg4[%c0_7, %c0_8] : memref<8x128xf32, #tpu.memory_space<vmem>>, vector<8x128xf32>
    tpu.vector_store %arg4[%c0_7, %c0_8], %25 {strides = array<i32>} : memref<8x128xf32, #tpu.memory_space<vmem>>, vector<8x128xf32>,
    return
  }
  func.func @transform_0(%arg0: i32, %arg1: memref<1xi32, #tpu.memory_space<smem>>) -> (i32, i32) {
    %c0_i32 = arith.constant 0 : i32
    %c0_i32_0 = arith.constant 0 : i32
    return %arg0, %c0_i32 : i32, i32
  }
  func.func @transform_1(%arg0: i32, %arg1: memref<1xi32, #tpu.memory_space<smem>>) -> (i32, i32) {
    %c0_i32 = arith.constant 0 : i32
    %c0_i32_0 = arith.constant 0 : i32
    return %arg0, %c0_i32 : i32, i32
  }
  func.func @transform_2(%arg0: i32, %arg1: memref<1xi32, #tpu.memory_space<smem>>) -> (i32, i32) {
    %c0_i32 = arith.constant 0 : i32
    %c0_i32_0 = arith.constant 0 : i32
    return %arg0, %c0_i32 : i32, i32
  }
}

</mosaic_0001>

<llo_original>
// kernel: tpu_custom_call.1
$region0: #{tpu_custom_call.1}
  #allocation0 [shape = 'u32[]', space=smem, size = 0x4, offset = 0x4, fixed_abs, tag = 'smem constant byte address 0x4 - core index']
  #allocation1 [shape = 'u32[144,128]{1,0:T(1,128)}', space=vmem, size = 0x12000, scoped, tag = 'internal scratch']
  #allocation2 [shape = 's32[1]{0}', space=sflag, size = 0x4, scoped, tag = 'scoped memory for tpu_custom_call.1']
  #allocation3 [shape = 's32[1]{0:T(128)S(6)}', space=smem, size = 0x200, scoped, tag = 'prefetched SMEM operand 0']
  %s0 = inlined_call_operand.<no memory space> [shape: s32[1], index: 0, kind: input, shape index: {}]
  %s1 = inlined_call_operand.hbm [shape: f32[8,128], index: 1, kind: input, shape index: {}]
  %s2 = inlined_call_operand.hbm [shape: f32[8,128], index: 2, kind: input, shape index: {}]
  %s3 = inlined_call_operand.hbm [shape: f32[8,128], index: 3, kind: output, shape index: {}]
  %s4 = sld [smem:[#allocation0]]
  $region26: #{tpu_custom_call.1} parent=0
    _
  %s6 = ssub.s32 1, %s4
  %s7 = scalar_select 0, %s6, %s4
  %8 = sst [smem:[#allocation3]] %s0
  $region1: #{tpu_custom_call.1} parent=0
    #allocation4 [shape = 'u8[4096]{0}', space=vmem, size = 0x1000, scoped, tag = 'input window, operand 1, single buffered']
    #allocation5 [shape = 's32[1]{0}', space=sflag, size = 0x4, scoped, tag = 'scoped memory for tpu_custom_call.1']
    #allocation6 [shape = 's32[1]{0}', space=sflag, size = 0x4, scoped, tag = 'scoped memory for tpu_custom_call.1']
    #allocation7 [shape = 'u8[4096]{0}', space=vmem, size = 0x1000, scoped, tag = 'input window, operand 2, single buffered']
    #allocation8 [shape = 's32[1]{0}', space=sflag, size = 0x4, scoped, tag = 'scoped memory for tpu_custom_call.1']
    #allocation9 [shape = 'u8[4096]{0}', space=vmem, size = 0x1000, scoped, tag = 'output window, operand 0, single buffered']
    %9 = vsyncpa [#allocation5], 0
    %10 = vsyncpa [#allocation8], 0
    %11 = vsyncpa [#allocation6], 0
    // Predicated region
    $region2: #{tpu_custom_call.1} parent=1 // pred_check
      _
    $region3: #{tpu_custom_call.1} parent=1 // pred_check_branch
      %13 = sbr.rel (0) target = $region5
    $region4: #{tpu_custom_call.1} parent=1 // pred_region
      %s15 = ssub.s32 128, 128
      %16 = vsyncadd [#allocation5], %s15
      %s18 = sshll.u32 [#allocation4], 4
      %s19 = int_to_ptr.vmem [resolvable:$true] %s18
      %21 = dma.hbm_to_vmem [thread:$0]  %s1, 128, %s19, [#allocation5]
    $region5: #{tpu_custom_call.1} parent=1 // pred_fallthru
      _
    // Predicated region
    $region6: #{tpu_custom_call.1} parent=1 // pred_check
      _
    $region7: #{tpu_custom_call.1} parent=1 // pred_check_branch
      %23 = sbr.rel (0) target = $region9
    $region8: #{tpu_custom_call.1} parent=1 // pred_region
      %s25 = ssub.s32 128, 128
      %26 = vsyncadd [#allocation8], %s25
      %s28 = sshll.u32 [#allocation7], 4
      %s29 = int_to_ptr.vmem [resolvable:$true] %s28
      %31 = dma.hbm_to_vmem [thread:$0]  %s2, 128, %s29, [#allocation8]
    $region9: #{tpu_custom_call.1} parent=1 // pred_fallthru
      _
    // Predicated region
    $region10: #{tpu_custom_call.1} parent=1 // pred_check
      _
    $region11: #{tpu_custom_call.1} parent=1 // pred_check_branch
      %33 = sbr.rel (0) target = $region13
    $region12: #{tpu_custom_call.1} parent=1 // pred_region
      %34 = dma.done [#allocation5], 128
    $region13: #{tpu_custom_call.1} parent=1 // pred_fallthru
      _
    // Predicated region
    $region14: #{tpu_custom_call.1} parent=1 // pred_check
      _
    $region15: #{tpu_custom_call.1} parent=1 // pred_check_branch
      %36 = sbr.rel (0) target = $region17
    $region16: #{tpu_custom_call.1} parent=1 // pred_region
      %37 = dma.done [#allocation8], 128
    $region17: #{tpu_custom_call.1} parent=1 // pred_fallthru
      _
    %v38 = vld [vmem:[#allocation4] sm:$0xff]
    %v39 = vld [vmem:[#allocation7] sm:$0xff]
    %v40 = vsub.f32 2.0, %v38
    %v41 = vmax.f32 %v40, 0.0
    %v42 = vmul.f32 %v38, %v38
    %v43 = vmul.f32 %v41, %v41
    %v44 = vsub.f32 %v43, %v42
    %v45 = vmul.f32 %v39, %v44
    %v46 = vadd.f32 %v42, %v45
    %v47 = vlaneseq
    %v48 = vshrl.u32 %v47, 7
    %v49 = vmul.u32 %v48, 128
    %v50 = vlaneseq
    %v51 = vand.u32 %v50, 127
    %v52 = vadd.s32 %v49, %v51
    %s53 = smul.u32 0, 1024
    %v54 = vstv %s53
    %v55 = vadd.s32 %v52, %v54
    %s56 = sld [smem:[#allocation3]]
    %v57 = vstv %s56
    %vm58 = vcmp.lt.s32.totalorder %v55, %v57
    %v59 = vsel %vm58, %v46, 0.0
    %v60 = vadd.f32 %v59, 0.0
    %61 = vst [vmem:[#allocation9] sm:$0xff] %v60
    // Predicated region
    $region18: #{tpu_custom_call.1} parent=1 // pred_check
      _
    $region19: #{tpu_custom_call.1} parent=1 // pred_check_branch
      %63 = sbr.rel (0) target = $region21
    $region20: #{tpu_custom_call.1} parent=1 // pred_region
      %s65 = ssub.s32 128, 128
      %66 = vsyncadd [#allocation6], %s65
      %s68 = sshll.u32 [#allocation9], 4
      %s69 = int_to_ptr.vmem [resolvable:$true] %s68
      %71 = dma.vmem_to_hbm [thread:$0]  %s69, 128, %s3, [#allocation6]
    $region21: #{tpu_custom_call.1} parent=1 // pred_fallthru
      _
    // Predicated region
    $region22: #{tpu_custom_call.1} parent=1 // pred_check
      _
    $region23: #{tpu_custom_call.1} parent=1 // pred_check_branch
      %73 = sbr.rel (0) target = $region25
    $region24: #{tpu_custom_call.1} parent=1 // pred_region
      %74 = dma.done [#allocation6], 128
    $region25: #{tpu_custom_call.1} parent=1 // pred_fallthru
      _
    %75 = vsyncpa [#allocation5], 1
    %76 = vsyncpa [#allocation8], 1
    %77 = vsyncpa [#allocation6], 1

</llo_original>
